<compile_context>
chip_gen: v7x
topology: tpu7x:2x2x1
jax: 0.10.0
libtpu: 0.0.40
codegen_flags: <defaults>
</compile_context>

<pallas_src>
import functools

import jax
import jax.numpy as jnp
from jax import lax
from jax.experimental import pallas as pl
from jax.experimental.pallas import tpu as pltpu


def _round_up(x, m):
    return ((x + m - 1) // m) * m


def _focal_loss_kernel(x_ref, t_ref, a_ref, o_ref, acc_ref, *,
                       gamma, tile_n, tiles_per_core, num_valid_rows):
    c = pl.program_id(0)          # core / partial-sum index ("parallel")
    i = pl.program_id(1)          # row-tile index ("arbitrary", reduction)

    @pl.when(i == 0)
    def _():
        acc_ref[...] = jnp.zeros_like(acc_ref)

    x = x_ref[...].astype(jnp.float32)        # (tile_n, C), cast in VMEM (free)
    t = t_ref[...]                            # (tile_n, 1) int32
    n, ncls = x.shape

    # numerically stable log_softmax along the class (lane) axis
    m = jnp.max(x, axis=1, keepdims=True)
    lse = m + jnp.log(jnp.sum(jnp.exp(x - m), axis=1, keepdims=True))
    logsm = x - lse                           # (tile_n, C)

    # gather logpt / alpha at the target class via one-hot select
    cls = lax.broadcasted_iota(jnp.int32, (n, ncls), 1)
    onehot = cls == t                         # (tile_n, C)
    logpt = jnp.sum(jnp.where(onehot, logsm, 0.0), axis=1, keepdims=True)
    pt = jnp.exp(logpt)
    at = jnp.sum(jnp.where(onehot, a_ref[...].astype(jnp.float32), 0.0),
                 axis=1, keepdims=True)

    # focal modulation (1 - pt) ** gamma; keep small integer gamma on the VALU
    g = float(gamma)
    if g == 0.0:
        focal = jnp.ones_like(pt)
    elif g.is_integer() and 0 < int(g) <= 8:
        w = 1.0 - pt
        focal = w
        for _ in range(int(g) - 1):
            focal = focal * w
    else:
        focal = jnp.power(1.0 - pt, jnp.float32(g))

    loss = -focal * (logpt * at)              # (tile_n, 1)

    # mask rows past the true row count (ragged last tile / clamped dup tile)
    block = c * tiles_per_core + i
    rows = block * tile_n + lax.broadcasted_iota(jnp.int32, (n, 1), 0)
    loss = jnp.where(rows < num_valid_rows, loss, 0.0)

    acc_ref[...] += jnp.sum(loss, axis=0, keepdims=True)   # (1, 1) partial

    @pl.when(i == tiles_per_core - 1)
    def _():
        # lane-dense (8,128) store; the wrapper reads element [0,0] per block
        o_ref[...] = jnp.broadcast_to(acc_ref[...], o_ref.shape)


def focal_loss(logits, target, *, gamma=0.0, alpha=None, size_average=True,
               max_tile_rows=None):
    """Matches FocalLoss.forward semantics.

    logits: (N, C) or (N, C, *spatial) array (any float dtype, e.g. bf16/f32)
    target: integer array reshapeable to (-1, 1)
    alpha : None | float | list of per-class weights
    """
    x = jnp.asarray(logits)
    if x.ndim > 2:
        # Same flattening as the torch module (input.view/transpose/view).
        n0, c0 = x.shape[0], x.shape[1]
        x = x.reshape(n0, c0, -1)
        x = jnp.transpose(x, (0, 2, 1))
        x = x.reshape(-1, c0)
    num_rows, num_classes = x.shape

    t = jnp.asarray(target).reshape(-1, 1).astype(jnp.int32)

    # alpha handling (as in FocalLoss.__init__)
    if alpha is None:
        alpha_vec = jnp.ones((num_classes,), jnp.float32)   # neutral weight
    elif isinstance(alpha, (float, int)):
        alpha_vec = jnp.array([alpha, 1.0 - alpha], jnp.float32)
    else:
        alpha_vec = jnp.asarray(alpha, jnp.float32)
    alpha_2d = alpha_vec.reshape(1, -1)

    # --- tiling -----------------------------------------------------------
    itemsize = jnp.dtype(x.dtype).itemsize
    row_bytes = max(num_classes * itemsize, 1)
    sub = max(8, 32 // itemsize)                    # sublane packing: f32=8, bf16=16
    tile_n = (2 * 1024 * 1024) // row_bytes         # ~2 MiB of logits per buffer
    tile_n = max(sub, min(1024, (tile_n // sub) * sub))
    tile_n = min(tile_n, _round_up(num_rows, sub))
    if max_tile_rows is not None:
        tile_n = min(tile_n, max(sub, _round_up(int(max_tile_rows), sub)))

    num_blocks = pl.cdiv(num_rows, tile_n)
    num_cores = 2 if num_blocks >= 2 else 1         # use both TCs on v7x
    tiles_per_core = pl.cdiv(num_blocks, num_cores)
    last_block = num_blocks - 1

    def row_map(c, i):
        # clamp so the DMA never starts past the array; the duplicated tail
        # tile is fully masked out inside the kernel.
        return (jnp.minimum(c * tiles_per_core + i, last_block), 0)

    kernel = functools.partial(
        _focal_loss_kernel,
        gamma=float(gamma),
        tile_n=tile_n,
        tiles_per_core=tiles_per_core,
        num_valid_rows=num_rows,
    )

    out = pl.pallas_call(
        kernel,
        out_shape=jax.ShapeDtypeStruct((num_cores * 8, 128), jnp.float32),
        grid=(num_cores, tiles_per_core),
        in_specs=[
            pl.BlockSpec((tile_n, num_classes), row_map),
            pl.BlockSpec((tile_n, 1), row_map),
            pl.BlockSpec((1, num_classes), lambda c, i: (0, 0)),
        ],
        out_specs=pl.BlockSpec((8, 128), lambda c, i: (c, 0)),
        scratch_shapes=[pltpu.VMEM((1, 1), jnp.float32)],
        compiler_params=pltpu.CompilerParams(
            dimension_semantics=("parallel", "arbitrary"),
            vmem_limit_bytes=32 * 1024 * 1024,
        ),
    )(x, t, alpha_2d)

    total = jnp.sum(out[0::8, 0])                   # add per-core partial sums
    if size_average:
        total = total / jnp.float32(num_rows)
    return total


def _focal_loss_ref(logits, target, *, gamma, alpha, size_average):
    """Plain-JAX reference for verification."""
    x = jnp.asarray(logits, jnp.float32)
    if x.ndim > 2:
        n0, c0 = x.shape[0], x.shape[1]
        x = jnp.transpose(x.reshape(n0, c0, -1), (0, 2, 1)).reshape(-1, c0)
    t = jnp.asarray(target).reshape(-1).astype(jnp.int32)
    logsm = jax.nn.log_softmax(x, axis=1)
    logpt = jnp.take_along_axis(logsm, t[:, None], axis=1)[:, 0]
    pt = jnp.exp(logpt)
    if alpha is None:
        at = jnp.ones_like(logpt)
    elif isinstance(alpha, (float, int)):
        at = jnp.array([alpha, 1.0 - alpha], jnp.float32)[t]
    else:
        at = jnp.asarray(alpha, jnp.float32)[t]
    loss = -1.0 * (1.0 - pt) ** gamma * (logpt * at)
    return loss.mean() if size_average else loss.sum()


if __name__ == "__main__":
    key = jax.random.PRNGKey(0)
    k1, k2, k3, k4, k5, k6 = jax.random.split(key, 6)

    # Case 1: docstring shape [batch, 2], float alpha, gamma=2 (integer path), mean.
    logits1 = jax.random.normal(k1, (8, 2), dtype=jnp.float32)
    target1 = jax.random.randint(k2, (8, 1), 0, 2, dtype=jnp.int32)
    out1 = jax.block_until_ready(
        focal_loss(logits1, target1, gamma=2.0, alpha=0.25, size_average=True))
    ref1 = _focal_loss_ref(logits1, target1, gamma=2.0, alpha=0.25,
                           size_average=True)
    assert jnp.allclose(out1, ref1, atol=1e-5, rtol=1e-5), (out1, ref1)

    # Case 2: 4D bf16 input, list alpha, non-integer gamma, sum reduction.
    # Small tile forces multi-tile accumulation across both core partials and
    # a ragged (masked) last tile.
    logits2 = jax.random.normal(k3, (2, 4, 7, 7), dtype=jnp.bfloat16)
    target2 = jax.random.randint(k4, (2, 7, 7), 0, 4, dtype=jnp.int32)
    out2 = jax.block_until_ready(
        focal_loss(logits2, target2, gamma=1.5, alpha=[0.1, 0.2, 0.3, 0.4],
                   size_average=False, max_tile_rows=16))
    ref2 = _focal_loss_ref(logits2, target2, gamma=1.5,
                           alpha=[0.1, 0.2, 0.3, 0.4], size_average=False)
    assert jnp.allclose(out2, ref2, atol=1e-4, rtol=1e-4), (out2, ref2)

    # Case 3: gamma=0 (plain weighted NLL), alpha=None, mean, ragged tiling.
    logits3 = jax.random.normal(k5, (50, 3), dtype=jnp.float32)
    target3 = jax.random.randint(k6, (50, 1), 0, 3, dtype=jnp.int32)
    out3 = jax.block_until_ready(
        focal_loss(logits3, target3, gamma=0.0, alpha=None,
                   size_average=True, max_tile_rows=16))
    ref3 = _focal_loss_ref(logits3, target3, gamma=0.0, alpha=None,
                           size_average=True)
    assert jnp.allclose(out3, ref3, atol=1e-5, rtol=1e-5), (out3, ref3)

    print("KERNEL_OK")
</pallas_src>

<mosaic_0001>
module attributes {stable_mosaic.version = 11 : i64} {
  func.func @_focal_loss_kernel(%arg0: i32, %arg1: i32, %arg2: memref<8x2xf32, #tpu.memory_space<vmem>>, %arg3: memref<8x1xi32, #tpu.memory_space<vmem>>, %arg4: memref<1x2xf32, #tpu.memory_space<vmem>>, %arg5: memref<8x128xf32, #tpu.memory_space<vmem>>, %arg6: memref<1x1xf32, #tpu.memory_space<vmem>>) attributes {dimension_semantics = [#tpu.dimension_semantics<parallel>, #tpu.dimension_semantics<arbitrary>], iteration_bounds = array<i64: 1, 1>, scalar_prefetch = 0 : i64, scratch_operands = 1 : i64, tpu.core_type = #tpu.core_type<tc>, window_params = [{transform_indices = @transform_0, window_bounds = array<i64: 8, 2>}, {transform_indices = @transform_1, window_bounds = array<i64: 8, 1>}, {pipeline_mode = #tpu.pipeline_mode<synchronous>, transform_indices = @transform_2, window_bounds = array<i64: 1, 2>}, {transform_indices = @transform_3, window_bounds = array<i64: 8, 128>}]} {
    %c0_i32 = arith.constant 0 : i32
    %0 = arith.cmpi eq, %arg1, %c0_i32 : i32
    %1 = arith.extui %0 : i1 to i32
    %c0_i32_0 = arith.constant 0 : i32
    %2 = arith.cmpi ne, %1, %c0_i32_0 : i32
    scf.if %2 {
      %cst_22 = arith.constant 0.000000e+00 : f32
      %56 = vector.broadcast %cst_22 : f32 to vector<1x1xf32>
      %c0_23 = arith.constant 0 : index
      %c0_24 = arith.constant 0 : index
      %57 = vector.load %arg6[%c0_23, %c0_24] : memref<1x1xf32, #tpu.memory_space<vmem>>, vector<1x1xf32>
      tpu.vector_store %arg6[%c0_23, %c0_24], %56 {strides = array<i32>} : memref<1x1xf32, #tpu.memory_space<vmem>>, vector<1x1xf32>,
    } else {
    }
    %c0 = arith.constant 0 : index
    %c0_1 = arith.constant 0 : index
    %3 = vector.load %arg2[%c0, %c0_1] : memref<8x2xf32, #tpu.memory_space<vmem>>, vector<8x2xf32>
    %c0_2 = arith.constant 0 : index
    %c0_3 = arith.constant 0 : index
    %4 = vector.load %arg3[%c0_2, %c0_3] : memref<8x1xi32, #tpu.memory_space<vmem>>, vector<8x1xi32>
    %cst = arith.constant dense<0xFF800000> : vector<8xf32>
    %5 = vector.multi_reduction <maximumf>, %3, %cst [1] : vector<8x2xf32> to vector<8xf32>
    %6 = vector.shape_cast %5 : vector<8xf32> to vector<8x1xf32>
    %7 = vector.broadcast %6 : vector<8x1xf32> to vector<8x2xf32>
    %8 = arith.subf %3, %7 : vector<8x2xf32>
    %9 = math.exp %8 : vector<8x2xf32>
    %cst_4 = arith.constant dense<0.000000e+00> : vector<8xf32>
    %10 = vector.multi_reduction <add>, %9, %cst_4 [1] : vector<8x2xf32> to vector<8xf32>
    %11 = vector.shape_cast %10 : vector<8xf32> to vector<8x1xf32>
    %12 = math.log %11 : vector<8x1xf32>
    %13 = arith.addf %6, %12 : vector<8x1xf32>
    %14 = vector.broadcast %13 : vector<8x1xf32> to vector<8x2xf32>
    %15 = arith.subf %3, %14 : vector<8x2xf32>
    %16 = tpu.iota {dimensions = array<i32: 1>} : vector<8x2xi32>
    %17 = vector.broadcast %4 : vector<8x1xi32> to vector<8x2xi32>
    %18 = arith.cmpi eq, %16, %17 : vector<8x2xi32>
    %cst_5 = arith.constant 0.000000e+00 : f32
    %19 = vector.broadcast %cst_5 : f32 to vector<8x2xf32>
    %20 = arith.select %18, %15, %19 : vector<8x2xi1>, vector<8x2xf32>
    %cst_6 = arith.constant dense<0.000000e+00> : vector<8xf32>
    %21 = vector.multi_reduction <add>, %20, %cst_6 [1] : vector<8x2xf32> to vector<8xf32>
    %22 = vector.shape_cast %21 : vector<8xf32> to vector<8x1xf32>
    %23 = math.exp %22 : vector<8x1xf32>
    %c0_7 = arith.constant 0 : index
    %c0_8 = arith.constant 0 : index
    %24 = vector.load %arg4[%c0_7, %c0_8] : memref<1x2xf32, #tpu.memory_space<vmem>>, vector<1x2xf32>
    %cst_9 = arith.constant 0.000000e+00 : f32
    %25 = vector.shape_cast %24 : vector<1x2xf32> to vector<1x2xf32>
    %26 = vector.broadcast %25 : vector<1x2xf32> to vector<8x2xf32>
    %27 = vector.broadcast %cst_9 : f32 to vector<8x2xf32>
    %28 = arith.select %18, %26, %27 : vector<8x2xi1>, vector<8x2xf32>
    %cst_10 = arith.constant dense<0.000000e+00> : vector<8xf32>
    %29 = vector.multi_reduction <add>, %28, %cst_10 [1] : vector<8x2xf32> to vector<8xf32>
    %30 = vector.shape_cast %29 : vector<8xf32> to vector<8x1xf32>
    %cst_11 = arith.constant 1.000000e+00 : f32
    %31 = vector.broadcast %cst_11 : f32 to vector<8x1xf32>
    %32 = arith.subf %31, %23 : vector<8x1xf32>
    %33 = arith.mulf %32, %32 : vector<8x1xf32>
    %cst_12 = arith.constant 0.000000e+00 : f32
    %34 = vector.broadcast %cst_12 : f32 to vector<8x1xf32>
    %35 = arith.subf %34, %33 : vector<8x1xf32>
    %36 = arith.mulf %22, %30 : vector<8x1xf32>
    %37 = arith.mulf %35, %36 : vector<8x1xf32>
    %c1_i32 = arith.constant 1 : i32
    %38 = arith.muli %arg0, %c1_i32 : i32
    %39 = arith.addi %38, %arg1 : i32
    %c8_i32 = arith.constant 8 : i32
    %40 = arith.muli %39, %c8_i32 : i32
    %41 = tpu.iota {dimensions = array<i32: 0>} : vector<8x1xi32>
    %42 = vector.broadcast %40 : i32 to vector<8x1xi32>
    %43 = arith.addi %42, %41 : vector<8x1xi32>
    %c8_i32_13 = arith.constant 8 : i32
    %44 = vector.broadcast %c8_i32_13 : i32 to vector<8x1xi32>
    %45 = arith.cmpi slt, %43, %44 : vector<8x1xi32>
    %cst_14 = arith.constant 0.000000e+00 : f32
    %46 = vector.broadcast %cst_14 : f32 to vector<8x1xf32>
    %47 = arith.select %45, %37, %46 : vector<8x1xi1>, vector<8x1xf32>
    %c0_15 = arith.constant 0 : index
    %c0_16 = arith.constant 0 : index
    %48 = vector.load %arg6[%c0_15, %c0_16] : memref<1x1xf32, #tpu.memory_space<vmem>>, vector<1x1xf32>
    %cst_17 = arith.constant dense<0.000000e+00> : vector<1xf32>
    %49 = vector.multi_reduction <add>, %47, %cst_17 [0] : vector<8x1xf32> to vector<1xf32>
    %50 = vector.shape_cast %49 : vector<1xf32> to vector<1x1xf32>
    %51 = arith.addf %48, %50 : vector<1x1xf32>
    %c0_18 = arith.constant 0 : index
    %c0_19 = arith.constant 0 : index
    %52 = vector.load %arg6[%c0_18, %c0_19] : memref<1x1xf32, #tpu.memory_space<vmem>>, vector<1x1xf32>
    tpu.vector_store %arg6[%c0_18, %c0_19], %51 {strides = array<i32>} : memref<1x1xf32, #tpu.memory_space<vmem>>, vector<1x1xf32>,
    %c0_i32_20 = arith.constant 0 : i32
    %53 = arith.cmpi eq, %arg1, %c0_i32_20 : i32
    %54 = arith.extui %53 : i1 to i32
    %c0_i32_21 = arith.constant 0 : i32
    %55 = arith.cmpi ne, %54, %c0_i32_21 : i32
    scf.if %55 {
      %c0_22 = arith.constant 0 : index
      %c0_23 = arith.constant 0 : index
      %56 = vector.load %arg6[%c0_22, %c0_23] : memref<1x1xf32, #tpu.memory_space<vmem>>, vector<1x1xf32>
      %57 = vector.shape_cast %56 : vector<1x1xf32> to vector<1x1xf32>
      %58 = vector.broadcast %57 : vector<1x1xf32> to vector<8x128xf32>
      %c0_24 = arith.constant 0 : index
      %c0_25 = arith.constant 0 : index
      %59 = vector.load %arg5[%c0_24, %c0_25] : memref<8x128xf32, #tpu.memory_space<vmem>>, vector<8x128xf32>
      tpu.vector_store %arg5[%c0_24, %c0_25], %58 {strides = array<i32>} : memref<8x128xf32, #tpu.memory_space<vmem>>, vector<8x128xf32>,
    } else {
    }
    return
  }
  func.func @transform_0(%arg0: i32, %arg1: i32) -> (i32, i32) {
    %c1_i32 = arith.constant 1 : i32
    %0 = arith.muli %arg0, %c1_i32 : i32
    %1 = arith.addi %0, %arg1 : i32
    %c0_i32 = arith.constant 0 : i32
    %2 = arith.minsi %1, %c0_i32 : i32
    %c0_i32_0 = arith.constant 0 : i32
    %c0_i32_1 = arith.constant 0 : i32
    return %2, %c0_i32_0 : i32, i32
  }
  func.func @transform_1(%arg0: i32, %arg1: i32) -> (i32, i32) {
    %c1_i32 = arith.constant 1 : i32
    %0 = arith.muli %arg0, %c1_i32 : i32
    %1 = arith.addi %0, %arg1 : i32
    %c0_i32 = arith.constant 0 : i32
    %2 = arith.minsi %1, %c0_i32 : i32
    %c0_i32_0 = arith.constant 0 : i32
    %c0_i32_1 = arith.constant 0 : i32
    return %2, %c0_i32_0 : i32, i32
  }
  func.func @transform_2(%arg0: i32, %arg1: i32) -> (i32, i32) {
    %c0_i32 = arith.constant 0 : i32
    %c0_i32_0 = arith.constant 0 : i32
    %c0_i32_1 = arith.constant 0 : i32
    return %c0_i32, %c0_i32_0 : i32, i32
  }
  func.func @transform_3(%arg0: i32, %arg1: i32) -> (i32, i32) {
    %c0_i32 = arith.constant 0 : i32
    %c0_i32_0 = arith.constant 0 : i32
    return %arg0, %c0_i32 : i32, i32
  }
}

</mosaic_0001>

<llo_original>
// kernel: tpu_custom_call.1
$region0: #{tpu_custom_call.1}
  #allocation0 [shape = 'u32[]', space=smem, size = 0x4, offset = 0x4, fixed_abs, tag = 'smem constant byte address 0x4 - core index']
  #allocation1 [shape = 'u32[144,128]{1,0:T(1,128)}', space=vmem, size = 0x12000, scoped, tag = 'internal scratch']
  #allocation2 [shape = 'f32[1,1]{1,0:T(1,128)}', space=vmem, size = 0x200, scoped, tag = 'scratch operand']
  %s0 = inlined_call_operand.vmem [shape: f32[8,2], index: 0, kind: input, shape index: {}]
  %s1 = inlined_call_operand.vmem [shape: s32[8,1], index: 1, kind: input, shape index: {}]
  %s2 = inlined_call_operand.vmem [shape: f32[1,2], index: 2, kind: input, shape index: {}]
  %s3 = inlined_call_operand.hbm [shape: f32[8,128], index: 3, kind: output, shape index: {}]
  %s4 = sld [smem:[#allocation0]]
  $region30: #{tpu_custom_call.1} parent=0
    _
  %s6 = ssub.s32 1, %s4
  %s7 = scalar_select 0, %s6, %s4
  $region1: #{tpu_custom_call.1} parent=0
    #allocation3 [shape = 'u8[4096]{0}', space=vmem, size = 0x1000, scoped, tag = 'output window, operand 0, single buffered']
    #allocation4 [shape = 's32[1]{0}', space=sflag, size = 0x4, scoped, tag = 'scoped memory for tpu_custom_call.1']
    %8 = vsyncpa [#allocation4], 0
    // Predicated region
    $region2: #{tpu_custom_call.1} parent=1 // pred_check
      _
    $region3: #{tpu_custom_call.1} parent=1 // pred_check_branch
      %10 = sbr.rel (0) target = $region5
    $region4: #{tpu_custom_call.1} parent=1 // pred_region
      %s11 = sadd.s32 0, 0
      %p12 = scmp.lt.s32.totalorder %s11, 0
      %s13 = scalar_select %p12, %s11, 0
      %p14 = scmp.lt.s32.totalorder %s13, 0
      %s15 = scalar_select %p14, %s13, 0
      %s16 = smul.addr %s15, 8
      %s17 = scalar_lea.vmem %s0, %s16
      %s18 = sadd.s32 0, 0
      %p19 = scmp.lt.s32.totalorder %s18, 0
      %s20 = scalar_select %p19, %s18, 0
    $region5: #{tpu_custom_call.1} parent=1 // pred_fallthru
      _
    // Predicated region
    $region6: #{tpu_custom_call.1} parent=1 // pred_check
      _
    $region7: #{tpu_custom_call.1} parent=1 // pred_check_branch
      %22 = sbr.rel (0) target = $region9
    $region8: #{tpu_custom_call.1} parent=1 // pred_region
      %s23 = sadd.s32 0, 0
      %p24 = scmp.lt.s32.totalorder %s23, 0
      %s25 = scalar_select %p24, %s23, 0
      %p26 = scmp.lt.s32.totalorder %s25, 0
      %s27 = scalar_select %p26, %s25, 0
      %s28 = smul.addr %s27, 8
      %s29 = scalar_lea.vmem %s1, %s28
      %s30 = sadd.s32 0, 0
      %p31 = scmp.lt.s32.totalorder %s30, 0
      %s32 = scalar_select %p31, %s30, 0
    $region9: #{tpu_custom_call.1} parent=1 // pred_fallthru
      _
    // Predicated region
    $region10: #{tpu_custom_call.1} parent=1 // pred_check
      _
    $region11: #{tpu_custom_call.1} parent=1 // pred_check_branch
      %34 = sbr.rel (0) target = $region13
    $region12: #{tpu_custom_call.1} parent=1 // pred_region
      _
    $region13: #{tpu_custom_call.1} parent=1 // pred_fallthru
      _
    %s35 = sadd.s32 0, 0
    %p36 = scmp.lt.s32.totalorder %s35, 0
    %s37 = scalar_select %p36, %s35, 0
    %p38 = scmp.lt.s32.totalorder %s37, 0
    %s39 = scalar_select %p38, %s37, 0
    %s40 = smul.addr %s39, 8
    %s41 = scalar_lea.vmem %s0, %s40
    %s42 = sadd.s32 0, 0
    %p43 = scmp.lt.s32.totalorder %s42, 0
    %s44 = scalar_select %p43, %s42, 0
    %p45 = scmp.lt.s32.totalorder %s44, 0
    %s46 = scalar_select %p45, %s44, 0
    %s47 = smul.addr %s46, 8
    %s48 = scalar_lea.vmem %s1, %s47
    %s49 = sadd.s32 0, 0
    %p50 = scmp.lt.s32.totalorder %s49, 0
    %s51 = scalar_select %p50, %s49, 0
    %p52 = scmp.lt.s32.totalorder %s51, 0
    %s53 = scalar_select %p52, %s51, 0
    %s54 = smul.addr %s53, 8
    %s55 = scalar_lea.vmem %s0, %s54
    %s56 = sadd.s32 0, 0
    %p57 = scmp.lt.s32.totalorder %s56, 0
    %s58 = scalar_select %p57, %s56, 0
    %s59 = sadd.s32 0, 0
    %p60 = scmp.lt.s32.totalorder %s59, 0
    %s61 = scalar_select %p60, %s59, 0
    %p62 = scmp.lt.s32.totalorder %s61, 0
    %s63 = scalar_select %p62, %s61, 0
    %s64 = smul.addr %s63, 8
    %s65 = scalar_lea.vmem %s1, %s64
    %s66 = sadd.s32 0, 0
    %p67 = scmp.lt.s32.totalorder %s66, 0
    %s68 = scalar_select %p67, %s66, 0
    %p69 = scmp.eq.s32.totalorder 0, 0
    // Predicated region
    $region14: #{tpu_custom_call.1} parent=1 // pred_check
      %p70 = pneg %p69
    $region15: #{tpu_custom_call.1} parent=1 // pred_check_branch
      %72 = sbr.rel (%p70) target = $region17
    $region16: #{tpu_custom_call.1} parent=1 // pred_region
      %vm73 = vcmask 0
      %74 = vst.msk [vmem:[#allocation2] sm:$0x1] %vm73, 0.0
    $region17: #{tpu_custom_call.1} parent=1 // pred_fallthru
      _
    %v75 = vld [vmem:[%s55] sm:$0xff]
    %v76 = vld [vmem:[%s65] sm:$0xff]
    %vm77 = vcmask 15360
    %v78 = vsel %vm77, %v75, -inf
    %79 = vmax.xlane.f32.xlu0 %v78
    %v80 = vpop.xlane.xlu0 %79
    %v81 = vsub.f32 %v75, %v80
    %v82 = vmul.f32 %v81, 1.442695
    %v83 = vpow.pop %v82
    %v84 = vsel %vm77, %v83, 0.0
    %85 = vadd.xlane.f32.xlu0 %v84
    %v86 = vpop.xlane.xlu0 %85
    %v87 = vlog2.pop %v86
    %v88 = vmul.f32 %v87, 0.6931472
    %v89 = vadd.f32 %v80, %v88
    %v90 = vsub.f32 %v75, %v89
    %v91 = vlaneseq
    %v92 = vand.u32 %v91, 127
    %93 = vset.pattern.permute.xlu0 0
    %94 = vperm.xlu0 %93, %v76
    %v95 = vpop.permute.xlu0 %94
    %vm96 = vcmp.eq.s32.totalorder %v92, %v95
    %v97 = vsel %vm96, %v90, 0.0
    %v98 = vsel %vm77, %v97, 0.0
    %99 = vadd.xlane.f32.xlu0 %v98
    %v100 = vpop.xlane.xlu0 %99
    %v101 = vmul.f32 %v100, 1.442695
    %v102 = vpow.pop %v101
    %v103 = vld [vmem:[%s2] sm:$0x1]
    %v105 = vlaneseq
    %v106 = vshrl.u32 %v105, 7
    %v107 = vsub.s32 0, %v106
    %v108 = vrot.slane %v103, %v107
    %v110 = vsel %vm96, %v108, 0.0
    %v111 = vsel %vm77, %v110, 0.0
    %112 = vadd.xlane.f32.xlu0 %v111
    %v113 = vpop.xlane.xlu0 %112
    %v114 = vsub.f32 1.0, %v102
    %v115 = vmul.f32 %v114, %v114
    %v116 = vsub.f32 0.0, %v115
    %v117 = vmul.f32 %v100, %v113
    %v118 = vmul.f32 %v116, %v117
    %s119 = sadd.s32 0, 0
    %s120 = smul.u32 %s119, 8
    %v121 = vlaneseq
    %v122 = vshrl.u32 %v121, 7
    %v123 = vstv %s120
    %v124 = vadd.s32 %v123, %v122
    %vm125 = vcmp.lt.s32.totalorder %v124, 8
    %v126 = vsel %vm125, %v118, 0.0
    %v127 = vld [vmem:[#allocation2] sm:$0x1]
    %v128 = vrot.slane %v126, 4
    %v129 = vadd.f32 %v126, %v128
    %v130 = vrot.slane %v129, 2
    %v131 = vadd.f32 %v129, %v130
    %v132 = vrot.slane %v131, 1
    %v133 = vadd.f32 %v131, %v132
    %v134 = vadd.f32 %v127, %v133
    %vm135 = vcmask 0
    %136 = vst.msk [vmem:[#allocation2] sm:$0x1] %vm135, %v134
    // Predicated region
    $region18: #{tpu_custom_call.1} parent=1 // pred_check
      %p137 = pneg %p69
    $region19: #{tpu_custom_call.1} parent=1 // pred_check_branch
      %139 = sbr.rel (%p137) target = $region21
    $region20: #{tpu_custom_call.1} parent=1 // pred_region
      %v140 = vld [vmem:[#allocation2] sm:$0x1]
      %v142 = vlaneseq
      %v143 = vshrl.u32 %v142, 7
      %v144 = vsub.s32 0, %v143
      %v145 = vrot.slane %v140, %v144
      %146 = vset.pattern.permute.xlu0 0
      %147 = vperm.xlu0 %146, %v145
      %v148 = vpop.permute.xlu0 %147
      %150 = vst [vmem:[#allocation3] sm:$0xff] %v148
    $region21: #{tpu_custom_call.1} parent=1 // pred_fallthru
      _
    // Predicated region
    $region22: #{tpu_custom_call.1} parent=1 // pred_check
      _
    $region23: #{tpu_custom_call.1} parent=1 // pred_check_branch
      %152 = sbr.rel (0) target = $region25
    $region24: #{tpu_custom_call.1} parent=1 // pred_region
      %s154 = ssub.s32 128, 128
      %155 = vsyncadd [#allocation4], %s154
      %s157 = sshll.u32 [#allocation3], 4
      %s158 = int_to_ptr.vmem [resolvable:$true] %s157
      %160 = dma.vmem_to_hbm [thread:$0]  %s158, 128, %s3, [#allocation4]
    $region25: #{tpu_custom_call.1} parent=1 // pred_fallthru
      _
    // Predicated region
    $region26: #{tpu_custom_call.1} parent=1 // pred_check
      _
    $region27: #{tpu_custom_call.1} parent=1 // pred_check_branch
      %162 = sbr.rel (0) target = $region29
    $region28: #{tpu_custom_call.1} parent=1 // pred_region
      %163 = dma.done [#allocation4], 128
    $region29: #{tpu_custom_call.1} parent=1 // pred_fallthru
      _
    %164 = vsyncpa [#allocation4], 1

</llo_original>
